<compile_context>
chip_gen: v7x
topology: tpu7x:2x2x1
jax: 0.10.0
libtpu: 0.0.40
codegen_flags: <defaults>
</compile_context>

<pallas_src>
import jax
import jax.numpy as jnp
from jax.experimental import pallas as pl
from jax.experimental.pallas import tpu as pltpu

LN_EPS = 1e-5  # nn.LayerNorm default


# --------------------------------------------------------------------------
# Kernels
# --------------------------------------------------------------------------
def _layernorm_rows_f32(x_ref, gamma_ref, beta_ref):
    """Two-pass LayerNorm over the last axis, f32 statistics."""
    xf = x_ref[...].astype(jnp.float32)
    inv_d = 1.0 / x_ref.shape[1]
    mean = jnp.sum(xf, axis=-1, keepdims=True) * inv_d
    xc = xf - mean
    var = jnp.sum(xc * xc, axis=-1, keepdims=True) * inv_d
    inv_std = jax.lax.rsqrt(var + LN_EPS)
    return (xc * inv_std) * gamma_ref[...].astype(jnp.float32) \
        + beta_ref[...].astype(jnp.float32)


def prenorm_linear_ws_kernel(x_ref, gamma_ref, beta_ref, w_ref, b_ref, o_ref):
    """Weight-stationary path: W fully VMEM-resident, 1-D row grid.

    x_ref:(tm,D)  gamma/beta:(1,D)  w_ref:(D,Dout_p)  b_ref:(1,Dout_p)
    o_ref:(tm,Dout_p)
    """
    y = _layernorm_rows_f32(x_ref, gamma_ref, beta_ref)
    y = y.astype(w_ref.dtype)
    out = jnp.dot(y, w_ref[...], preferred_element_type=jnp.float32)
    out = out + b_ref[...].astype(jnp.float32)
    o_ref[...] = out.astype(o_ref.dtype)


def prenorm_linear_tiled_kernel(x_ref, gamma_ref, beta_ref, w_ref, b_ref,
                                o_ref, y_scratch):
    """Column-tiled path: LN computed once per row tile (j == 0) into VMEM
    scratch, reused for every output-column tile j.

    x_ref:(tm,D)  w_ref:(D,tn)  b_ref:(1,tn)  o_ref:(tm,tn)  y_scratch:(tm,D)
    """
    @pl.when(pl.program_id(1) == 0)
    def _():
        y = _layernorm_rows_f32(x_ref, gamma_ref, beta_ref)
        y_scratch[...] = y.astype(y_scratch.dtype)

    out = jnp.dot(y_scratch[...], w_ref[...], preferred_element_type=jnp.float32)
    out = out + b_ref[...].astype(jnp.float32)
    o_ref[...] = out.astype(o_ref.dtype)


# --------------------------------------------------------------------------
# Wrapper
# --------------------------------------------------------------------------
def _round_up(n, m):
    return ((n + m - 1) // m) * m


def _vmem_budget_bytes():
    """Per-generation VMEM budget with headroom (v5e/v6e 128 MiB, v7x 64 MiB)."""
    cap = 64 * 1024 * 1024  # conservative fallback (v7x physical)
    try:
        info = pltpu.get_tpu_info()
        cap = int(getattr(info, "vmem_capacity_bytes", cap))
    except Exception:
        pass
    return max(int(cap * 0.70), 24 * 1024 * 1024)


def prenorm_linear(x, gamma, beta, w, b, *, tm=None, tn=None,
                   use_bf16_matmul=False):
    """PreNorm(dim, Linear): x (B,S,D); gamma/beta (D,); w (D,Dout); b (Dout,)."""
    B, S, D = x.shape
    Dout = w.shape[1]
    rows = B * S
    x2d = x.reshape(rows, D)

    # --- lane-dense output: pad Dout up to a multiple of 128 (zero cols) ----
    Dout_p = max(_round_up(Dout, 128), 128)
    if Dout_p != Dout:
        w = jnp.pad(w, ((0, 0), (0, Dout_p - Dout)))
        b = jnp.pad(b, ((0, Dout_p - Dout),))

    # --- matmul operand dtype (opt-in bf16 path for f32 inputs) -------------
    if use_bf16_matmul and x.dtype == jnp.float32:
        mm_dtype = jnp.bfloat16
        w = w.astype(jnp.bfloat16)
    else:
        mm_dtype = x.dtype

    x_it = jnp.dtype(x.dtype).itemsize
    w_it = jnp.dtype(w.dtype).itemsize
    o_it = x_it
    mm_it = jnp.dtype(mm_dtype).itemsize

    budget = _vmem_budget_bytes()
    w_bytes = D * Dout_p * w_it

    # --- choose weight-stationary vs column-tiled ---------------------------
    weight_stationary = (tn is None) and (w_bytes <= budget // 3)

    if weight_stationary:
        tn_eff = Dout_p
        # per-row VMEM: x double-buffer + out double-buffer + f32 LN temps + y
        per_row = 2 * D * x_it + 2 * Dout_p * o_it + 3 * D * 4 + D * mm_it
        avail = budget - w_bytes
    else:
        if tn is None:
            if Dout_p % 512 == 0 and Dout_p >= 1024:
                tn_eff = 512
            elif Dout_p % 256 == 0 and Dout_p >= 512:
                tn_eff = 256
            else:
                tn_eff = 128
        else:
            tn_eff = int(tn)
        assert Dout_p % tn_eff == 0, "tn must divide padded Dout"
        # per-row VMEM: x double-buffer + out tile double-buffer + f32 LN temps
        # + y_scratch row; W column tile double-buffer is a fixed cost.
        per_row = 2 * D * x_it + 2 * tn_eff * o_it + 3 * D * 4 + D * mm_it
        avail = budget - 2 * D * tn_eff * w_it

    if tm is None:
        tm_eff = max(8, min(2048, (max(avail, 0) // max(per_row, 1)) // 8 * 8))
        tm_eff = min(tm_eff, _round_up(rows, 8))
    else:
        tm_eff = max(8, (int(tm) // 8) * 8)

    grid_rows = pl.cdiv(rows, tm_eff)

    w_reads = 1 if weight_stationary else grid_rows
    cost = pl.CostEstimate(
        flops=int(2 * rows * D * Dout_p),
        transcendentals=int(rows),
        bytes_accessed=int(rows * D * x_it + w_reads * w_bytes
                           + rows * Dout_p * o_it + 2 * D * 4 + Dout_p * w_it),
    )

    gamma2d = gamma.reshape(1, D)
    beta2d = beta.reshape(1, D)
    b2d = b.reshape(1, Dout_p)
    out_shape = jax.ShapeDtypeStruct((rows, Dout_p), x.dtype)

    if weight_stationary:
        out2d = pl.pallas_call(
            prenorm_linear_ws_kernel,
            out_shape=out_shape,
            grid_spec=pltpu.PrefetchScalarGridSpec(
                num_scalar_prefetch=0,
                grid=(grid_rows,),
                in_specs=[
                    pl.BlockSpec((tm_eff, D), lambda i: (i, 0)),     # x rows
                    pl.BlockSpec((1, D), lambda i: (0, 0)),          # gamma
                    pl.BlockSpec((1, D), lambda i: (0, 0)),          # beta
                    pl.BlockSpec((D, Dout_p), lambda i: (0, 0)),     # W (resident)
                    pl.BlockSpec((1, Dout_p), lambda i: (0, 0)),     # bias
                ],
                out_specs=pl.BlockSpec((tm_eff, Dout_p), lambda i: (i, 0)),
            ),
            compiler_params=pltpu.CompilerParams(
                dimension_semantics=("parallel",),
                vmem_limit_bytes=int(budget)),
            cost_estimate=cost,
        )(x2d, gamma2d, beta2d, w, b2d)
    else:
        out2d = pl.pallas_call(
            prenorm_linear_tiled_kernel,
            out_shape=out_shape,
            grid_spec=pltpu.PrefetchScalarGridSpec(
                num_scalar_prefetch=0,
                grid=(grid_rows, Dout_p // tn_eff),
                in_specs=[
                    pl.BlockSpec((tm_eff, D), lambda i, j: (i, 0)),  # x rows
                    pl.BlockSpec((1, D), lambda i, j: (0, 0)),       # gamma
                    pl.BlockSpec((1, D), lambda i, j: (0, 0)),       # beta
                    pl.BlockSpec((D, tn_eff), lambda i, j: (0, j)),  # W col tile
                    pl.BlockSpec((1, tn_eff), lambda i, j: (0, j)),  # bias tile
                ],
                out_specs=pl.BlockSpec((tm_eff, tn_eff), lambda i, j: (i, j)),
                scratch_shapes=[pltpu.VMEM((tm_eff, D), mm_dtype)],  # LN reuse
            ),
            compiler_params=pltpu.CompilerParams(
                # j axis has a cross-iteration scratch dependence -> arbitrary.
                dimension_semantics=("parallel", "arbitrary"),
                vmem_limit_bytes=int(budget)),
            cost_estimate=cost,
        )(x2d, gamma2d, beta2d, w, b2d)

    if Dout_p != Dout:
        out2d = out2d[:, :Dout]
    return out2d.reshape(B, S, Dout)


# --------------------------------------------------------------------------
# Pure-JAX reference (torch semantics: f32 LayerNorm, f32 matmul)
# --------------------------------------------------------------------------
def prenorm_linear_ref(x, gamma, beta, w, b):
    xf = x.astype(jnp.float32)
    mean = jnp.mean(xf, axis=-1, keepdims=True)
    var = jnp.mean((xf - mean) ** 2, axis=-1, keepdims=True)
    y = (xf - mean) * jax.lax.rsqrt(var + LN_EPS) * gamma.astype(jnp.float32) \
        + beta.astype(jnp.float32)
    out = jnp.dot(y.astype(x.dtype), w,
                  precision=jax.lax.Precision.HIGHEST,
                  preferred_element_type=jnp.float32)
    return (out + b.astype(jnp.float32)).astype(x.dtype)


if __name__ == "__main__":
    key = jax.random.PRNGKey(0)
    (k_x, k_w, k_b, k_g, k_be, k_x2, k_w2, k_b2) = jax.random.split(key, 8)

    # ---- test 1: small shapes -> weight-stationary path (Dout padded to 128)
    B, S, D, Dout = 2, 8, 32, 32
    x = jax.random.normal(k_x, (B, S, D), dtype=jnp.float32)
    gamma = 1.0 + 0.1 * jax.random.normal(k_g, (D,), dtype=jnp.float32)
    beta = 0.05 * jax.random.normal(k_be, (D,), dtype=jnp.float32)
    w = jax.random.normal(k_w, (D, Dout), dtype=jnp.float32) * 0.02
    b = jax.random.normal(k_b, (Dout,), dtype=jnp.float32) * 0.01

    out = prenorm_linear(x, gamma, beta, w, b)
    jax.block_until_ready(out)
    ref = prenorm_linear_ref(x, gamma, beta, w, b)
    assert out.shape == ref.shape, "shape mismatch (ws path)"
    assert jnp.allclose(out, ref, atol=2e-3, rtol=2e-3), "mismatch (ws path)"

    # ---- test 2: force the column-tiled path (scratch LN reuse, j axis) ----
    B2, S2, D2, Dout2 = 2, 64, 256, 512
    x2 = jax.random.normal(k_x2, (B2, S2, D2), dtype=jnp.float32)
    gamma2 = 1.0 + 0.1 * jax.random.normal(k_g, (D2,), dtype=jnp.float32)
    beta2 = 0.05 * jax.random.normal(k_be, (D2,), dtype=jnp.float32)
    w2 = jax.random.normal(k_w2, (D2, Dout2), dtype=jnp.float32) * 0.02
    b2 = jax.random.normal(k_b2, (Dout2,), dtype=jnp.float32) * 0.01

    out2 = prenorm_linear(x2, gamma2, beta2, w2, b2, tn=256)
    jax.block_until_ready(out2)
    ref2 = prenorm_linear_ref(x2, gamma2, beta2, w2, b2)
    assert out2.shape == ref2.shape, "shape mismatch (tiled path)"
    assert jnp.allclose(out2, ref2, atol=5e-3, rtol=5e-3), "mismatch (tiled path)"

    # TODO(synk): PyTorch's `fn` is arbitrary; only fn = nn.Linear is fused here.
    print("KERNEL_OK")
</pallas_src>

<mosaic_0001>
module attributes {stable_mosaic.version = 11 : i64} {
  func.func @prenorm_linear_ws_kernel(%arg0: i32, %arg1: memref<16x32xf32, #tpu.memory_space<vmem>>, %arg2: memref<1x32xf32, #tpu.memory_space<vmem>>, %arg3: memref<1x32xf32, #tpu.memory_space<vmem>>, %arg4: memref<32x128xf32, #tpu.memory_space<vmem>>, %arg5: memref<1x128xf32, #tpu.memory_space<vmem>>, %arg6: memref<16x128xf32, #tpu.memory_space<vmem>>) attributes {dimension_semantics = [#tpu.dimension_semantics<parallel>], iteration_bounds = array<i64: 1>, scalar_prefetch = 0 : i64, scratch_operands = 0 : i64, tpu.core_type = #tpu.core_type<tc>, window_params = [{transform_indices = @transform_0, window_bounds = array<i64: 16, 32>}, {pipeline_mode = #tpu.pipeline_mode<synchronous>, transform_indices = @transform_1, window_bounds = array<i64: 1, 32>}, {pipeline_mode = #tpu.pipeline_mode<synchronous>, transform_indices = @transform_2, window_bounds = array<i64: 1, 32>}, {pipeline_mode = #tpu.pipeline_mode<synchronous>, transform_indices = @transform_3, window_bounds = array<i64: 32, 128>}, {pipeline_mode = #tpu.pipeline_mode<synchronous>, transform_indices = @transform_4, window_bounds = array<i64: 1, 128>}, {transform_indices = @transform_5, window_bounds = array<i64: 16, 128>}]} {
    %c0 = arith.constant 0 : index
    %c0_0 = arith.constant 0 : index
    %0 = vector.load %arg1[%c0, %c0_0] : memref<16x32xf32, #tpu.memory_space<vmem>>, vector<16x32xf32>
    %cst = arith.constant dense<0.000000e+00> : vector<16xf32>
    %1 = vector.multi_reduction <add>, %0, %cst [1] : vector<16x32xf32> to vector<16xf32>
    %2 = vector.shape_cast %1 : vector<16xf32> to vector<16x1xf32>
    %cst_1 = arith.constant 3.125000e-02 : f32
    %3 = vector.broadcast %cst_1 : f32 to vector<16x1xf32>
    %4 = arith.mulf %2, %3 : vector<16x1xf32>
    %5 = vector.broadcast %4 : vector<16x1xf32> to vector<16x32xf32>
    %6 = arith.subf %0, %5 : vector<16x32xf32>
    %7 = arith.mulf %6, %6 : vector<16x32xf32>
    %cst_2 = arith.constant dense<0.000000e+00> : vector<16xf32>
    %8 = vector.multi_reduction <add>, %7, %cst_2 [1] : vector<16x32xf32> to vector<16xf32>
    %9 = vector.shape_cast %8 : vector<16xf32> to vector<16x1xf32>
    %cst_3 = arith.constant 3.125000e-02 : f32
    %10 = vector.broadcast %cst_3 : f32 to vector<16x1xf32>
    %11 = arith.mulf %9, %10 : vector<16x1xf32>
    %cst_4 = arith.constant 9.99999974E-6 : f32
    %12 = vector.broadcast %cst_4 : f32 to vector<16x1xf32>
    %13 = arith.addf %11, %12 : vector<16x1xf32>
    %14 = math.rsqrt %13 : vector<16x1xf32>
    %15 = vector.broadcast %14 : vector<16x1xf32> to vector<16x32xf32>
    %16 = arith.mulf %6, %15 : vector<16x32xf32>
    %c0_5 = arith.constant 0 : index
    %c0_6 = arith.constant 0 : index
    %17 = vector.load %arg2[%c0_5, %c0_6] : memref<1x32xf32, #tpu.memory_space<vmem>>, vector<1x32xf32>
    %18 = vector.broadcast %17 : vector<1x32xf32> to vector<16x32xf32>
    %19 = arith.mulf %16, %18 : vector<16x32xf32>
    %c0_7 = arith.constant 0 : index
    %c0_8 = arith.constant 0 : index
    %20 = vector.load %arg3[%c0_7, %c0_8] : memref<1x32xf32, #tpu.memory_space<vmem>>, vector<1x32xf32>
    %21 = vector.broadcast %20 : vector<1x32xf32> to vector<16x32xf32>
    %22 = arith.addf %19, %21 : vector<16x32xf32>
    %c0_9 = arith.constant 0 : index
    %c0_10 = arith.constant 0 : index
    %23 = vector.load %arg4[%c0_9, %c0_10] : memref<32x128xf32, #tpu.memory_space<vmem>>, vector<32x128xf32>
    %cst_11 = arith.constant dense<0.000000e+00> : vector<16x128xf32>
    %24 = tpu.matmul %22, %23, %cst_11 {dimension_numbers = #tpu.dot_dimension_numbers<[1], [0], [0], [1], [0, 0, 1, 1], [], []>} : vector<16x32xf32>, vector<32x128xf32>, vector<16x128xf32> -> vector<16x128xf32>
    %c0_12 = arith.constant 0 : index
    %c0_13 = arith.constant 0 : index
    %25 = vector.load %arg5[%c0_12, %c0_13] : memref<1x128xf32, #tpu.memory_space<vmem>>, vector<1x128xf32>
    %26 = vector.broadcast %25 : vector<1x128xf32> to vector<16x128xf32>
    %27 = arith.addf %24, %26 : vector<16x128xf32>
    %c0_14 = arith.constant 0 : index
    %c0_15 = arith.constant 0 : index
    %28 = vector.load %arg6[%c0_14, %c0_15] : memref<16x128xf32, #tpu.memory_space<vmem>>, vector<16x128xf32>
    tpu.vector_store %arg6[%c0_14, %c0_15], %27 {strides = array<i32>} : memref<16x128xf32, #tpu.memory_space<vmem>>, vector<16x128xf32>,
    return
  }
  func.func @transform_0(%arg0: i32) -> (i32, i32) {
    %c0_i32 = arith.constant 0 : i32
    %c0_i32_0 = arith.constant 0 : i32
    return %arg0, %c0_i32 : i32, i32
  }
  func.func @transform_1(%arg0: i32) -> (i32, i32) {
    %c0_i32 = arith.constant 0 : i32
    %c0_i32_0 = arith.constant 0 : i32
    %c0_i32_1 = arith.constant 0 : i32
    return %c0_i32, %c0_i32_0 : i32, i32
  }
  func.func @transform_2(%arg0: i32) -> (i32, i32) {
    %c0_i32 = arith.constant 0 : i32
    %c0_i32_0 = arith.constant 0 : i32
    %c0_i32_1 = arith.constant 0 : i32
    return %c0_i32, %c0_i32_0 : i32, i32
  }
  func.func @transform_3(%arg0: i32) -> (i32, i32) {
    %c0_i32 = arith.constant 0 : i32
    %c0_i32_0 = arith.constant 0 : i32
    %c0_i32_1 = arith.constant 0 : i32
    return %c0_i32, %c0_i32_0 : i32, i32
  }
  func.func @transform_4(%arg0: i32) -> (i32, i32) {
    %c0_i32 = arith.constant 0 : i32
    %c0_i32_0 = arith.constant 0 : i32
    %c0_i32_1 = arith.constant 0 : i32
    return %c0_i32, %c0_i32_0 : i32, i32
  }
  func.func @transform_5(%arg0: i32) -> (i32, i32) {
    %c0_i32 = arith.constant 0 : i32
    %c0_i32_0 = arith.constant 0 : i32
    return %arg0, %c0_i32 : i32, i32
  }
}

</mosaic_0001>

<llo_original>
// kernel: tpu_custom_call.1
$region0: #{tpu_custom_call.1}
  #allocation0 [shape = 'u32[]', space=smem, size = 0x4, offset = 0x4, fixed_abs, tag = 'smem constant byte address 0x4 - core index']
  #allocation1 [shape = 'u32[144,128]{1,0:T(1,128)}', space=vmem, size = 0x12000, scoped, tag = 'internal scratch']
  %s0 = inlined_call_operand.hbm [shape: f32[16,32], index: 0, kind: input, shape index: {}]
  %s1 = inlined_call_operand.vmem [shape: f32[1,32], index: 1, kind: input, shape index: {}]
  %s2 = inlined_call_operand.vmem [shape: f32[1,32], index: 2, kind: input, shape index: {}]
  %s3 = inlined_call_operand.hbm [shape: f32[32,128], index: 3, kind: input, shape index: {}]
  %s4 = inlined_call_operand.vmem [shape: f32[1,128], index: 4, kind: input, shape index: {}]
  %s5 = inlined_call_operand.hbm [shape: f32[16,128], index: 5, kind: output, shape index: {}]
  %s6 = sld [smem:[#allocation0]]
  $region38: #{tpu_custom_call.1} parent=0
    _
  %s8 = ssub.s32 1, %s6
  %s9 = scalar_select 0, %s8, %s6
  $region1: #{tpu_custom_call.1} parent=0
    #allocation2 [shape = 'u8[8192]{0}', space=vmem, size = 0x2000, scoped, tag = 'input window, operand 0, single buffered']
    #allocation3 [shape = 's32[1]{0}', space=sflag, size = 0x4, scoped, tag = 'scoped memory for tpu_custom_call.1']
    #allocation4 [shape = 's32[1]{0}', space=sflag, size = 0x4, scoped, tag = 'scoped memory for tpu_custom_call.1']
    #allocation5 [shape = 'u8[16384]{0}', space=vmem, size = 0x4000, scoped, tag = 'input window, operand 3, single buffered']
    #allocation6 [shape = 's32[1]{0}', space=sflag, size = 0x4, scoped, tag = 'scoped memory for tpu_custom_call.1']
    #allocation7 [shape = 'u8[8192]{0}', space=vmem, size = 0x2000, scoped, tag = 'output window, operand 0, single buffered']
    %10 = vsyncpa [#allocation3], 0
    %11 = vsyncpa [#allocation6], 0
    %12 = vsyncpa [#allocation4], 0
    // Predicated region
    $region2: #{tpu_custom_call.1} parent=1 // pred_check
      _
    $region3: #{tpu_custom_call.1} parent=1 // pred_check_branch
      %14 = sbr.rel (0) target = $region5
    $region4: #{tpu_custom_call.1} parent=1 // pred_region
      %s16 = ssub.s32 256, 256
      %17 = vsyncadd [#allocation3], %s16
      %s18 = sshll.u32 [#allocation2], 4
      %s19 = int_to_ptr.vmem [resolvable:$true] %s18
      %24 = dma.hbm_to_vmem [thread:$0]  %s0, 256, %s19, [#allocation3], 128, 128, 8
    $region5: #{tpu_custom_call.1} parent=1 // pred_fallthru
      _
    // Predicated region
    $region6: #{tpu_custom_call.1} parent=1 // pred_check
      _
    $region7: #{tpu_custom_call.1} parent=1 // pred_check_branch
      %26 = sbr.rel (0) target = $region9
    $region8: #{tpu_custom_call.1} parent=1 // pred_region
      _
    $region9: #{tpu_custom_call.1} parent=1 // pred_fallthru
      _
    // Predicated region
    $region10: #{tpu_custom_call.1} parent=1 // pred_check
      _
    $region11: #{tpu_custom_call.1} parent=1 // pred_check_branch
      %28 = sbr.rel (0) target = $region13
    $region12: #{tpu_custom_call.1} parent=1 // pred_region
      _
    $region13: #{tpu_custom_call.1} parent=1 // pred_fallthru
      _
    // Predicated region
    $region14: #{tpu_custom_call.1} parent=1 // pred_check
      _
    $region15: #{tpu_custom_call.1} parent=1 // pred_check_branch
      %30 = sbr.rel (0) target = $region17
    $region16: #{tpu_custom_call.1} parent=1 // pred_region
      %s32 = ssub.s32 512, 512
      %33 = vsyncadd [#allocation6], %s32
      %s34 = sshll.u32 [#allocation5], 4
      %s35 = int_to_ptr.vmem [resolvable:$true] %s34
      %40 = dma.hbm_to_vmem [thread:$0]  %s3, 512, %s35, [#allocation6], 128, 128, 8
    $region17: #{tpu_custom_call.1} parent=1 // pred_fallthru
      _
    // Predicated region
    $region18: #{tpu_custom_call.1} parent=1 // pred_check
      _
    $region19: #{tpu_custom_call.1} parent=1 // pred_check_branch
      %42 = sbr.rel (0) target = $region21
    $region20: #{tpu_custom_call.1} parent=1 // pred_region
      _
    $region21: #{tpu_custom_call.1} parent=1 // pred_fallthru
      _
    // Predicated region
    $region22: #{tpu_custom_call.1} parent=1 // pred_check
      _
    $region23: #{tpu_custom_call.1} parent=1 // pred_check_branch
      %44 = sbr.rel (0) target = $region25
    $region24: #{tpu_custom_call.1} parent=1 // pred_region
      %45 = dma.done [#allocation3], 256
    $region25: #{tpu_custom_call.1} parent=1 // pred_fallthru
      _
    // Predicated region
    $region26: #{tpu_custom_call.1} parent=1 // pred_check
      _
    $region27: #{tpu_custom_call.1} parent=1 // pred_check_branch
      %47 = sbr.rel (0) target = $region29
    $region28: #{tpu_custom_call.1} parent=1 // pred_region
      %48 = dma.done [#allocation6], 512
    $region29: #{tpu_custom_call.1} parent=1 // pred_fallthru
      _
    %v49 = vld [vmem:[#allocation2] sm:$0xff]
    %v50 = vld [vmem:[#allocation2 + $0x8] sm:$0xff]
    %vm51 = vcmask 261120
    %v52 = vsel %vm51, %v49, 0.0
    %53 = vadd.xlane.f32.xlu0 %v52
    %v54 = vpop.xlane.xlu0 %53
    %v55 = vsel %vm51, %v50, 0.0
    %56 = vadd.xlane.f32.xlu0 %v55
    %v57 = vpop.xlane.xlu0 %56
    %v58 = vmul.f32 %v54, 0.03125
    %v59 = vmul.f32 %v57, 0.03125
    %v60 = vsub.f32 %v49, %v58
    %v61 = vsub.f32 %v50, %v59
    %v62 = vmul.f32 %v60, %v60
    %v63 = vmul.f32 %v61, %v61
    %v64 = vsel %vm51, %v62, 0.0
    %65 = vadd.xlane.f32.xlu0 %v64
    %v66 = vpop.xlane.xlu0 %65
    %v67 = vsel %vm51, %v63, 0.0
    %68 = vadd.xlane.f32.xlu0 %v67
    %v69 = vpop.xlane.xlu0 %68
    %v70 = vmul.f32 %v66, 0.03125
    %v71 = vmul.f32 %v69, 0.03125
    %v72 = vadd.f32 %v70, 1e-05
    %v73 = vadd.f32 %v71, 1e-05
    %v74 = vrsqrt.pop %v72
    %v75 = vrsqrt.pop %v73
    %v76 = vmul.f32 %v60, %v74
    %v77 = vmul.f32 %v61, %v75
    %v78 = vld [vmem:[%s1] sm:$0x1]
    %v80 = vlaneseq
    %v81 = vshrl.u32 %v80, 7
    %v82 = vsub.s32 0, %v81
    %v83 = vrot.slane %v78, %v82
    %v85 = vmul.f32 %v76, %v83
    %v86 = vmul.f32 %v77, %v83
    %v87 = vld [vmem:[%s2] sm:$0x1]
    %v89 = vlaneseq
    %v90 = vshrl.u32 %v89, 7
    %v91 = vsub.s32 0, %v90
    %v92 = vrot.slane %v87, %v91
    %v94 = vadd.f32 %v85, %v92
    %v95 = vadd.f32 %v86, %v92
    %v96 = vld [vmem:[#allocation5] sm:$0xff]
    %v97 = vld [vmem:[#allocation5 + $0x8] sm:$0xff]
    %v98 = vld [vmem:[#allocation5 + $0x10] sm:$0xff]
    %v99 = vld [vmem:[#allocation5 + $0x18] sm:$0xff]
    %v100 = vld [vmem:[%s4] sm:$0x1]
    %v102 = vlaneseq
    %v103 = vshrl.u32 %v102, 7
    %v104 = vsub.s32 0, %v103
    %v105 = vrot.slane %v100, %v104
    %v108 = vsel %vm51, %v94, 0
    %v111 = vsel %vm51, %v95, 0
    %113 = vmatprep.subr.mxu0 0.0
    %114 = vmatpush1.msra.mxu0 %v96
    %115 = vmatprep.subr.mxu0 0.0
    %116 = vmatpush1.msra.mxu0 %v97
    %117 = vmatprep.subr.mxu0 0.0
    %118 = vmatpush1.msra.mxu0 %v98
    %119 = vmatprep.subr.mxu0 0.0
    %120 = vmatpush1.msra.mxu0 %v99
    %121 = vmatprep.subr.mxu0 0.0
    %122 = vmatpush1.msra.mxu0 0.0
    %123 = vmatprep.subr.mxu0 0.0
    %124 = vmatpush1.msra.mxu0 0.0
    %125 = vmatprep.subr.mxu0 0.0
    %126 = vmatpush1.msra.mxu0 0.0
    %127 = vmatprep.subr.mxu0 0.0
    %128 = vmatpush1.msra.mxu0 0.0
    %129 = vmatprep.subr.mxu0 0.0
    %130 = vmatpush1.msra.mxu0 0.0
    %131 = vmatprep.subr.mxu0 0.0
    %132 = vmatpush1.msra.mxu0 0.0
    %133 = vmatprep.subr.mxu0 0.0
    %134 = vmatpush1.msra.mxu0 0.0
    %135 = vmatprep.subr.mxu0 0.0
    %136 = vmatpush1.msra.mxu0 0.0
    %137 = vmatprep.subr.mxu0 0.0
    %138 = vmatpush1.msra.mxu0 0.0
    %139 = vmatprep.subr.mxu0 0.0
    %140 = vmatpush1.msra.mxu0 0.0
    %141 = vmatprep.subr.mxu0 0.0
    %142 = vmatpush1.msra.mxu0 0.0
    %143 = vmatprep.subr.mxu0 0.0
    %144 = vmatpush1.msra.mxu0 0.0
    %145 = vmatprep.subr.mxu0 0.0
    %146 = vmatpush1.msra.mxu0 0.0
    %147 = vmatprep.subr.mxu0 0.0
    %148 = vmatpush1.msra.mxu0 0.0
    %149 = vmatprep.subr.mxu0 0.0
    %150 = vmatpush1.msra.mxu0 0.0
    %151 = vmatprep.subr.mxu0 0.0
    %152 = vmatpush1.msra.mxu0 0.0
    %153 = vmatprep.subr.mxu0 0.0
    %154 = vmatpush1.msra.mxu0 0.0
    %155 = vmatprep.subr.mxu0 0.0
    %156 = vmatpush1.msra.mxu0 0.0
    %157 = vmatprep.subr.mxu0 0.0
    %158 = vmatpush1.msra.mxu0 0.0
    %159 = vmatprep.subr.mxu0 0.0
    %160 = vmatpush1.msra.mxu0 0.0
    %161 = vmatprep.subr.mxu0 0.0
    %162 = vmatpush1.msra.mxu0 0.0
    %163 = vmatprep.subr.mxu0 0.0
    %164 = vmatpush1.msra.mxu0 0.0
    %165 = vmatprep.subr.mxu0 0.0
    %166 = vmatpush1.msra.mxu0 0.0
    %167 = vmatprep.subr.mxu0 0.0
    %168 = vmatpush1.msra.mxu0 0.0
    %169 = vmatprep.subr.mxu0 0.0
    %170 = vmatpush1.msra.mxu0 0.0
    %171 = vmatprep.subr.mxu0 0.0
    %172 = vmatpush1.msra.mxu0 0.0
    %173 = vmatprep.subr.mxu0 0.0
    %174 = vmatpush1.msra.mxu0 0.0
    %175 = vmatprep.subr.mxu0 0.0
    %176 = vmatpush1.msra.mxu0 0.0
    %177 = vmatprep.mubr.f32.mxu0 0.0
    %178 = vmatmul.mubr.f32.gmra.mrb[0].mxu0 %v108
    %v179 = vpop.f32.mrb[0].mxu0
    %v180 = vadd.f32 %v105, %v179
    %v181 = vpop.f32.mrb[0].mxu0
    %182 = vmatprep.mubr.f32.mxu0 0.0
    %183 = vmatmul.mubr.f32.gmra.mrb[0].mxu0 %v111
    %v184 = vpop.f32.mrb[0].mxu0
    %v185 = vadd.f32 %v105, %v184
    %v186 = vpop.f32.mrb[0].mxu0
    %187 = vdwg.mxu0
    %188 = vst [vmem:[#allocation7] sm:$0xff] %v180
    %189 = vst [vmem:[#allocation7 + $0x8] sm:$0xff] %v185
    // Predicated region
    $region30: #{tpu_custom_call.1} parent=1 // pred_check
      _
    $region31: #{tpu_custom_call.1} parent=1 // pred_check_branch
      %191 = sbr.rel (0) target = $region33
    $region32: #{tpu_custom_call.1} parent=1 // pred_region
      %s193 = ssub.s32 256, 256
      %194 = vsyncadd [#allocation4], %s193
      %s195 = sshll.u32 [#allocation7], 4
      %s196 = int_to_ptr.vmem [resolvable:$true] %s195
      %201 = dma.vmem_to_hbm [thread:$0]  %s196, 256, %s5, [#allocation4], 128, 128, 8
    $region33: #{tpu_custom_call.1} parent=1 // pred_fallthru
      _
    // Predicated region
    $region34: #{tpu_custom_call.1} parent=1 // pred_check
      _
    $region35: #{tpu_custom_call.1} parent=1 // pred_check_branch
      %203 = sbr.rel (0) target = $region37
    $region36: #{tpu_custom_call.1} parent=1 // pred_region
      %204 = dma.done [#allocation4], 256
    $region37: #{tpu_custom_call.1} parent=1 // pred_fallthru
      _
    %205 = vsyncpa [#allocation3], 1
    %206 = vsyncpa [#allocation6], 1
    %207 = vsyncpa [#allocation4], 1

</llo_original>
